<compile_context>
chip_gen: v5e
topology: v5e:2x2
jax: 0.10.0
libtpu: 0.0.40
codegen_flags: <defaults>
</compile_context>

<pallas_src>
import jax
import jax.numpy as jnp
from jax.experimental import pallas as pl
from jax.experimental.pallas import tpu as pltpu

FACE_DIM = 512
AUDIO_DIM = 40
HIDDEN = 256
NUM_CLASSES = 6
OUT_PAD = 128          # lane-dense padded output width (avoids masked vst)
MAX_TB = 2048          # batch-tile cap (fits VMEM on v5e/v6e/v7x with margin)


def _round_up(x, m):
    return (x + m - 1) // m * m


def _choose_tile(B, max_tb=MAX_TB):
    """Pick (TB, Bp) for the batch dimension.

    Preferences (perf review):
      * avoid wrapper jnp.pad (full HBM round-trip of the activations):
        use a tile that divides B, or a single full-extent tile;
      * make TB as large as possible (<= MAX_TB) to amortize per-step overhead
        on this HBM-bound kernel;
      * for large batches keep >= 2 grid steps so v7x megacore splits work.
    """
    if B <= max_tb:
        if B > 1024 and B % 16 == 0:
            return B // 2, B          # two parallel steps, sublane-aligned halves
        return B, B                   # single full-extent tile, no padding
    # B > max_tb: largest multiple-of-8 divisor of B that fits the tile cap.
    for tb in range(max_tb, 7, -8):
        if B % tb == 0:
            return tb, B
    # Fallback for awkward large B: pad to a multiple of the tile.
    return max_tb, _round_up(B, max_tb)


def _mlp_kernel(face_ref, audio_ref, w1f_ref, w1a_ref, b1_ref, w2_ref, b2_ref,
                o_ref):
    # face_ref : (TB, 512) f32/bf16   w1f_ref : (512, 256) bf16
    # audio_ref: (TB, 40)  f32/bf16   w1a_ref : (40, 256)  bf16
    # b1_ref   : (1, 256)  f32        w2_ref  : (256, 128) bf16 (zero-padded)
    # b2_ref   : (1, 128)  f32 (zero-padded)
    # o_ref    : (TB, 128) bf16
    h = jnp.dot(face_ref[...].astype(jnp.bfloat16), w1f_ref[...],
                preferred_element_type=jnp.float32)
    h = h + jnp.dot(audio_ref[...].astype(jnp.bfloat16), w1a_ref[...],
                    preferred_element_type=jnp.float32)
    h = jnp.maximum(h + b1_ref[...], 0.0)          # bias + ReLU in f32
    # TODO(synk): dropout(p=0.3) omitted (eval-mode identity); training-mode
    # dropout would use pltpu.prng_seed + pltpu.prng_random_bits with a
    # per-grid-step seed offset and 1/(1-p) scaling.
    out = jnp.dot(h.astype(jnp.bfloat16), w2_ref[...],
                  preferred_element_type=jnp.float32) + b2_ref[...]
    o_ref[...] = out.astype(o_ref.dtype)


@jax.jit
def multimodal_emotion_classifier(face_feats, audio_feats, params):
    """Fused (concat) -> Linear -> ReLU -> Linear forward as one Pallas kernel."""
    w1f, w1a, b1, w2p, b2p = params

    B = face_feats.shape[0]
    TB, Bp = _choose_tile(B)
    if Bp != B:                                    # rare fallback only
        pad = Bp - B
        face_feats = jnp.pad(face_feats, ((0, pad), (0, 0)))
        audio_feats = jnp.pad(audio_feats, ((0, pad), (0, 0)))

    grid = (Bp // TB,)

    act_bytes = jnp.dtype(face_feats.dtype).itemsize
    flops = 2 * Bp * (FACE_DIM + AUDIO_DIM) * HIDDEN + 2 * Bp * HIDDEN * OUT_PAD
    bytes_accessed = (
        # weights (bf16) + biases (f32), read once (VMEM-resident)
        2 * (FACE_DIM * HIDDEN + AUDIO_DIM * HIDDEN + HIDDEN * OUT_PAD)
        + 4 * (HIDDEN + OUT_PAD)
        # activations in (producer dtype), padded bf16 output out
        + act_bytes * Bp * (FACE_DIM + AUDIO_DIM)
        + 2 * Bp * OUT_PAD
    )

    out_padded = pl.pallas_call(
        _mlp_kernel,
        out_shape=jax.ShapeDtypeStruct((Bp, OUT_PAD), jnp.bfloat16),
        grid=grid,
        in_specs=[
            pl.BlockSpec((TB, FACE_DIM), lambda i: (i, 0)),
            pl.BlockSpec((TB, AUDIO_DIM), lambda i: (i, 0)),
            # weights / biases: constant index_map -> stay VMEM-resident
            pl.BlockSpec((FACE_DIM, HIDDEN), lambda i: (0, 0)),
            pl.BlockSpec((AUDIO_DIM, HIDDEN), lambda i: (0, 0)),
            pl.BlockSpec((1, HIDDEN), lambda i: (0, 0)),
            pl.BlockSpec((HIDDEN, OUT_PAD), lambda i: (0, 0)),
            pl.BlockSpec((1, OUT_PAD), lambda i: (0, 0)),
        ],
        out_specs=pl.BlockSpec((TB, OUT_PAD), lambda i: (i, 0)),
        compiler_params=pltpu.CompilerParams(
            dimension_semantics=("parallel",),
            vmem_limit_bytes=32 * 1024 * 1024,     # large tiles on v5e's 16 MiB default
        ),
        cost_estimate=pl.CostEstimate(
            flops=flops, transcendentals=0, bytes_accessed=bytes_accessed),
    )(face_feats, audio_feats, w1f, w1a, b1, w2p, b2p)

    # TODO(synk): ideally the consumer (softmax/loss) reads the (Bp, 128) bf16
    # padded logits directly; the standalone slice below is one extra small
    # HBM pass kept here only to present the PyTorch-shaped (B, 6) output.
    return out_padded[:B, :NUM_CLASSES]


def init_params(key):
    """Deterministic init matching torch nn.Linear shapes (weights stored
    transposed, W1 pre-split into face/audio blocks, W2/b2 lane-padded)."""
    k1, k2, k3, k4, k5 = jax.random.split(key, 5)
    in_dim = FACE_DIM + AUDIO_DIM
    bound1 = 1.0 / jnp.sqrt(in_dim)
    bound2 = 1.0 / jnp.sqrt(HIDDEN)
    w1f = jax.random.uniform(k1, (FACE_DIM, HIDDEN), jnp.float32,
                             -bound1, bound1).astype(jnp.bfloat16)
    w1a = jax.random.uniform(k2, (AUDIO_DIM, HIDDEN), jnp.float32,
                             -bound1, bound1).astype(jnp.bfloat16)
    b1 = jax.random.uniform(k3, (1, HIDDEN), jnp.float32, -bound1, bound1)
    w2 = jax.random.uniform(k4, (HIDDEN, NUM_CLASSES), jnp.float32,
                            -bound2, bound2).astype(jnp.bfloat16)
    b2 = jax.random.uniform(k5, (1, NUM_CLASSES), jnp.float32, -bound2, bound2)
    # Zero-pad fc2 to a lane-dense 128-wide output; extra cols are sliced off.
    w2p = jnp.zeros((HIDDEN, OUT_PAD), jnp.bfloat16).at[:, :NUM_CLASSES].set(w2)
    b2p = jnp.zeros((1, OUT_PAD), jnp.float32).at[:, :NUM_CLASSES].set(b2)
    return w1f, w1a, b1, w2p, b2p


def reference_forward(face_feats, audio_feats, params):
    """Plain-JAX reference with the same bf16-input / f32-accumulate math."""
    w1f, w1a, b1, w2p, b2p = params
    h = (jnp.dot(face_feats.astype(jnp.bfloat16), w1f,
                 preferred_element_type=jnp.float32)
         + jnp.dot(audio_feats.astype(jnp.bfloat16), w1a,
                   preferred_element_type=jnp.float32)
         + b1)
    h = jnp.maximum(h, 0.0)
    out = (jnp.dot(h.astype(jnp.bfloat16), w2p,
                   preferred_element_type=jnp.float32) + b2p)
    return out[:, :NUM_CLASSES]


if __name__ == "__main__":
    key = jax.random.PRNGKey(0)
    kp, kf, ka = jax.random.split(key, 3)

    params = init_params(kp)

    B = 8  # small batch
    face_feats = jax.random.normal(kf, (B, FACE_DIM), jnp.float32)
    audio_feats = jax.random.normal(ka, (B, AUDIO_DIM), jnp.float32)

    ref = reference_forward(face_feats, audio_feats, params)

    # f32-producer path (casts to bf16 happen inside the kernel only).
    out = multimodal_emotion_classifier(face_feats, audio_feats, params)
    out = jax.block_until_ready(out)
    assert out.shape == (B, NUM_CLASSES)
    assert jnp.allclose(out.astype(jnp.float32), ref, atol=2e-2, rtol=2e-2), (
        float(jnp.max(jnp.abs(out.astype(jnp.float32) - ref))))

    # bf16-producer path (no casts anywhere; ~half the activation HBM traffic).
    out_bf16 = multimodal_emotion_classifier(
        face_feats.astype(jnp.bfloat16), audio_feats.astype(jnp.bfloat16), params)
    out_bf16 = jax.block_until_ready(out_bf16)
    assert jnp.allclose(out_bf16.astype(jnp.float32), ref, atol=5e-2, rtol=5e-2), (
        float(jnp.max(jnp.abs(out_bf16.astype(jnp.float32) - ref))))

    print("KERNEL_OK")
</pallas_src>

<mosaic_0001>
module attributes {stable_mosaic.version = 11 : i64} {
  func.func @_mlp_kernel(%arg0: i32, %arg1: memref<8x512xf32, #tpu.memory_space<vmem>>, %arg2: memref<8x40xf32, #tpu.memory_space<vmem>>, %arg3: memref<512x256xbf16, #tpu.memory_space<vmem>>, %arg4: memref<40x256xbf16, #tpu.memory_space<vmem>>, %arg5: memref<1x256xf32, #tpu.memory_space<vmem>>, %arg6: memref<256x128xbf16, #tpu.memory_space<vmem>>, %arg7: memref<1x128xf32, #tpu.memory_space<vmem>>, %arg8: memref<8x128xbf16, #tpu.memory_space<vmem>>) attributes {dimension_semantics = [#tpu.dimension_semantics<parallel>], iteration_bounds = array<i64: 1>, scalar_prefetch = 0 : i64, scratch_operands = 0 : i64, tpu.core_type = #tpu.core_type<tc>, window_params = [{transform_indices = @transform_0, window_bounds = array<i64: 8, 512>}, {transform_indices = @transform_1, window_bounds = array<i64: 8, 40>}, {pipeline_mode = #tpu.pipeline_mode<synchronous>, transform_indices = @transform_2, window_bounds = array<i64: 512, 256>}, {pipeline_mode = #tpu.pipeline_mode<synchronous>, transform_indices = @transform_3, window_bounds = array<i64: 40, 256>}, {pipeline_mode = #tpu.pipeline_mode<synchronous>, transform_indices = @transform_4, window_bounds = array<i64: 1, 256>}, {pipeline_mode = #tpu.pipeline_mode<synchronous>, transform_indices = @transform_5, window_bounds = array<i64: 256, 128>}, {pipeline_mode = #tpu.pipeline_mode<synchronous>, transform_indices = @transform_6, window_bounds = array<i64: 1, 128>}, {transform_indices = @transform_7, window_bounds = array<i64: 8, 128>}]} {
    %c0 = arith.constant 0 : index
    %c0_0 = arith.constant 0 : index
    %0 = vector.load %arg1[%c0, %c0_0] : memref<8x512xf32, #tpu.memory_space<vmem>>, vector<8x512xf32>
    %1 = arith.truncf %0 : vector<8x512xf32> to vector<8x512xbf16>
    %c0_1 = arith.constant 0 : index
    %c0_2 = arith.constant 0 : index
    %2 = vector.load %arg3[%c0_1, %c0_2] : memref<512x256xbf16, #tpu.memory_space<vmem>>, vector<512x256xbf16>
    %cst = arith.constant dense<0.000000e+00> : vector<8x256xf32>
    %3 = tpu.matmul %1, %2, %cst {dimension_numbers = #tpu.dot_dimension_numbers<[1], [0], [0], [1], [0, 0, 1, 1], [], []>} : vector<8x512xbf16>, vector<512x256xbf16>, vector<8x256xf32> -> vector<8x256xf32>
    %c0_3 = arith.constant 0 : index
    %c0_4 = arith.constant 0 : index
    %4 = vector.load %arg2[%c0_3, %c0_4] : memref<8x40xf32, #tpu.memory_space<vmem>>, vector<8x40xf32>
    %5 = arith.truncf %4 : vector<8x40xf32> to vector<8x40xbf16>
    %c0_5 = arith.constant 0 : index
    %c0_6 = arith.constant 0 : index
    %6 = vector.load %arg4[%c0_5, %c0_6] : memref<40x256xbf16, #tpu.memory_space<vmem>>, vector<40x256xbf16>
    %cst_7 = arith.constant dense<0.000000e+00> : vector<8x256xf32>
    %7 = tpu.matmul %5, %6, %cst_7 {dimension_numbers = #tpu.dot_dimension_numbers<[1], [0], [0], [1], [0, 0, 1, 1], [], []>} : vector<8x40xbf16>, vector<40x256xbf16>, vector<8x256xf32> -> vector<8x256xf32>
    %8 = arith.addf %3, %7 : vector<8x256xf32>
    %c0_8 = arith.constant 0 : index
    %c0_9 = arith.constant 0 : index
    %9 = vector.load %arg5[%c0_8, %c0_9] : memref<1x256xf32, #tpu.memory_space<vmem>>, vector<1x256xf32>
    %10 = vector.broadcast %9 : vector<1x256xf32> to vector<8x256xf32>
    %11 = arith.addf %8, %10 : vector<8x256xf32>
    %cst_10 = arith.constant 0.000000e+00 : f32
    %12 = vector.broadcast %cst_10 : f32 to vector<8x256xf32>
    %13 = arith.maximumf %11, %12 : vector<8x256xf32>
    %14 = arith.truncf %13 : vector<8x256xf32> to vector<8x256xbf16>
    %c0_11 = arith.constant 0 : index
    %c0_12 = arith.constant 0 : index
    %15 = vector.load %arg6[%c0_11, %c0_12] : memref<256x128xbf16, #tpu.memory_space<vmem>>, vector<256x128xbf16>
    %cst_13 = arith.constant dense<0.000000e+00> : vector<8x128xf32>
    %16 = tpu.matmul %14, %15, %cst_13 {dimension_numbers = #tpu.dot_dimension_numbers<[1], [0], [0], [1], [0, 0, 1, 1], [], []>} : vector<8x256xbf16>, vector<256x128xbf16>, vector<8x128xf32> -> vector<8x128xf32>
    %c0_14 = arith.constant 0 : index
    %c0_15 = arith.constant 0 : index
    %17 = vector.load %arg7[%c0_14, %c0_15] : memref<1x128xf32, #tpu.memory_space<vmem>>, vector<1x128xf32>
    %18 = vector.broadcast %17 : vector<1x128xf32> to vector<8x128xf32>
    %19 = arith.addf %16, %18 : vector<8x128xf32>
    %20 = arith.truncf %19 : vector<8x128xf32> to vector<8x128xbf16>
    %c0_16 = arith.constant 0 : index
    %c0_17 = arith.constant 0 : index
    %21 = vector.load %arg8[%c0_16, %c0_17] : memref<8x128xbf16, #tpu.memory_space<vmem>>, vector<8x128xbf16>
    tpu.vector_store %arg8[%c0_16, %c0_17], %20 {strides = array<i32>} : memref<8x128xbf16, #tpu.memory_space<vmem>>, vector<8x128xbf16>,
    return
  }
  func.func @transform_0(%arg0: i32) -> (i32, i32) {
    %c0_i32 = arith.constant 0 : i32
    %c0_i32_0 = arith.constant 0 : i32
    return %arg0, %c0_i32 : i32, i32
  }
  func.func @transform_1(%arg0: i32) -> (i32, i32) {
    %c0_i32 = arith.constant 0 : i32
    %c0_i32_0 = arith.constant 0 : i32
    return %arg0, %c0_i32 : i32, i32
  }
  func.func @transform_2(%arg0: i32) -> (i32, i32) {
    %c0_i32 = arith.constant 0 : i32
    %c0_i32_0 = arith.constant 0 : i32
    %c0_i32_1 = arith.constant 0 : i32
    return %c0_i32, %c0_i32_0 : i32, i32
  }
  func.func @transform_3(%arg0: i32) -> (i32, i32) {
    %c0_i32 = arith.constant 0 : i32
    %c0_i32_0 = arith.constant 0 : i32
    %c0_i32_1 = arith.constant 0 : i32
    return %c0_i32, %c0_i32_0 : i32, i32
  }
  func.func @transform_4(%arg0: i32) -> (i32, i32) {
    %c0_i32 = arith.constant 0 : i32
    %c0_i32_0 = arith.constant 0 : i32
    %c0_i32_1 = arith.constant 0 : i32
    return %c0_i32, %c0_i32_0 : i32, i32
  }
  func.func @transform_5(%arg0: i32) -> (i32, i32) {
    %c0_i32 = arith.constant 0 : i32
    %c0_i32_0 = arith.constant 0 : i32
    %c0_i32_1 = arith.constant 0 : i32
    return %c0_i32, %c0_i32_0 : i32, i32
  }
  func.func @transform_6(%arg0: i32) -> (i32, i32) {
    %c0_i32 = arith.constant 0 : i32
    %c0_i32_0 = arith.constant 0 : i32
    %c0_i32_1 = arith.constant 0 : i32
    return %c0_i32, %c0_i32_0 : i32, i32
  }
  func.func @transform_7(%arg0: i32) -> (i32, i32) {
    %c0_i32 = arith.constant 0 : i32
    %c0_i32_0 = arith.constant 0 : i32
    return %arg0, %c0_i32 : i32, i32
  }
}

</mosaic_0001>

<llo_original>
// kernel: multimodal_emotion_classifier.1
$region0: #{multimodal_emotion_classifier.1}
  #allocation0 [shape = 'u32[]', space=smem, size = 0x4, offset = 0x4, fixed_abs, tag = 'smem constant byte address 0x4 - core index']
  #allocation1 [shape = 'u32[72,128]{1,0:T(1,128)}', space=vmem, size = 0x9000, scoped, tag = 'internal scratch']
  %s0 = inlined_call_operand.hbm [shape: f32[8,512], index: 0, kind: input, shape index: {}]
  %s1 = inlined_call_operand.hbm [shape: f32[8,40], index: 1, kind: input, shape index: {}]
  %s2 = inlined_call_operand.hbm [shape: bf16[512,256], index: 2, kind: input, shape index: {}]
  %s3 = inlined_call_operand.hbm [shape: bf16[40,256], index: 3, kind: input, shape index: {}]
  %s4 = inlined_call_operand.vmem [shape: f32[1,256], index: 4, kind: input, shape index: {}]
  %s5 = inlined_call_operand.hbm [shape: bf16[256,128], index: 5, kind: input, shape index: {}]
  %s6 = inlined_call_operand.vmem [shape: f32[1,128], index: 6, kind: input, shape index: {}]
  %s7 = inlined_call_operand.hbm [shape: bf16[8,128], index: 7, kind: output, shape index: {}]
  %s8 = sld [smem:[#allocation0]]
  $region58: #{multimodal_emotion_classifier.1} parent=0
    _
  %s10 = ssub.s32 1, %s8
  %s11 = scalar_select 0, %s10, %s8
  $region1: #{multimodal_emotion_classifier.1} parent=0
    #allocation2 [shape = 'u8[16384]{0}', space=vmem, size = 0x4000, scoped, tag = 'input window, operand 0, single buffered']
    #allocation3 [shape = 's32[1]{0}', space=sflag, size = 0x4, scoped, tag = 'scoped memory for multimodal_emotion_classifier.1']
    #allocation4 [shape = 's32[1]{0}', space=sflag, size = 0x4, scoped, tag = 'scoped memory for multimodal_emotion_classifier.1']
    #allocation5 [shape = 'u8[4096]{0}', space=vmem, size = 0x1000, scoped, tag = 'input window, operand 1, single buffered']
    #allocation6 [shape = 's32[1]{0}', space=sflag, size = 0x4, scoped, tag = 'scoped memory for multimodal_emotion_classifier.1']
    #allocation7 [shape = 'u8[262144]{0}', space=vmem, size = 0x40000, scoped, tag = 'input window, operand 2, single buffered']
    #allocation8 [shape = 'u8[20480]{0}', space=vmem, size = 0x5000, scoped, tag = 'input window, operand 3, single buffered']
    #allocation9 [shape = 's32[1]{0}', space=sflag, size = 0x4, scoped, tag = 'scoped memory for multimodal_emotion_classifier.1']
    #allocation10 [shape = 'u8[65536]{0}', space=vmem, size = 0x10000, scoped, tag = 'input window, operand 5, single buffered']
    #allocation11 [shape = 'u8[2048]{0}', space=vmem, size = 0x800, scoped, tag = 'output window, operand 0, single buffered']
    %12 = vsyncpa [#allocation3], 0
    %13 = vsyncpa [#allocation6], 0
    %14 = vsyncpa [#allocation9], 0
    %15 = vsyncpa [#allocation4], 0
    // Predicated region
    $region2: #{multimodal_emotion_classifier.1} parent=1 // pred_check
      _
    $region3: #{multimodal_emotion_classifier.1} parent=1 // pred_check_branch
      %17 = sbr.rel (0) target = $region5
    $region4: #{multimodal_emotion_classifier.1} parent=1 // pred_region
      %19 = vsyncadd [#allocation3], 0
      %s21 = sshll.u32 %s0, 4
      %s22 = int_to_ptr.hbm [resolvable:$true] %s21
      %s23 = sshll.u32 [#allocation2], 4
      %s24 = int_to_ptr.vmem [resolvable:$true] %s23
      %26 = dma.hbm_to_vmem [thread:$0]  %s22, 512, %s24, [#allocation3]
    $region5: #{multimodal_emotion_classifier.1} parent=1 // pred_fallthru
      _
    // Predicated region
    $region6: #{multimodal_emotion_classifier.1} parent=1 // pred_check
      _
    $region7: #{multimodal_emotion_classifier.1} parent=1 // pred_check_branch
      %28 = sbr.rel (0) target = $region9
    $region8: #{multimodal_emotion_classifier.1} parent=1 // pred_region
      %30 = vsyncadd [#allocation6], 0
      %s32 = sshll.u32 %s1, 4
      %s33 = int_to_ptr.hbm [resolvable:$true] %s32
      %s34 = sshll.u32 [#allocation5], 4
      %s35 = int_to_ptr.vmem [resolvable:$true] %s34
      %37 = dma.hbm_to_vmem [thread:$0]  %s33, 128, %s35, [#allocation6]
    $region9: #{multimodal_emotion_classifier.1} parent=1 // pred_fallthru
      _
    // Predicated region
    $region10: #{multimodal_emotion_classifier.1} parent=1 // pred_check
      _
    $region11: #{multimodal_emotion_classifier.1} parent=1 // pred_check_branch
      %39 = sbr.rel (0) target = $region13
    $region12: #{multimodal_emotion_classifier.1} parent=1 // pred_region
      %41 = vsyncadd [#allocation6], 0
      %s42 = sshll.u32 %s2, 4
      %s43 = int_to_ptr.hbm [resolvable:$true] %s42
      %s44 = sshll.u32 [#allocation7], 4
      %s45 = int_to_ptr.vmem [resolvable:$true] %s44
      %50 = dma.hbm_to_vmem [thread:$0]  %s43, 8192, %s45, [#allocation6], 128, 128, 8
    $region13: #{multimodal_emotion_classifier.1} parent=1 // pred_fallthru
      _
    // Predicated region
    $region14: #{multimodal_emotion_classifier.1} parent=1 // pred_check
      _
    $region15: #{multimodal_emotion_classifier.1} parent=1 // pred_check_branch
      %52 = sbr.rel (0) target = $region17
    $region16: #{multimodal_emotion_classifier.1} parent=1 // pred_region
      %54 = vsyncadd [#allocation9], 0
      %s55 = sshll.u32 %s3, 4
      %s56 = int_to_ptr.hbm [resolvable:$true] %s55
      %s57 = sshll.u32 [#allocation8], 4
      %s58 = int_to_ptr.vmem [resolvable:$true] %s57
      %63 = dma.hbm_to_vmem [thread:$0]  %s56, 640, %s58, [#allocation9], 128, 128, 8
    $region17: #{multimodal_emotion_classifier.1} parent=1 // pred_fallthru
      _
    // Predicated region
    $region18: #{multimodal_emotion_classifier.1} parent=1 // pred_check
      _
    $region19: #{multimodal_emotion_classifier.1} parent=1 // pred_check_branch
      %65 = sbr.rel (0) target = $region21
    $region20: #{multimodal_emotion_classifier.1} parent=1 // pred_region
      _
    $region21: #{multimodal_emotion_classifier.1} parent=1 // pred_fallthru
      _
    // Predicated region
    $region22: #{multimodal_emotion_classifier.1} parent=1 // pred_check
      _
    $region23: #{multimodal_emotion_classifier.1} parent=1 // pred_check_branch
      %67 = sbr.rel (0) target = $region25
    $region24: #{multimodal_emotion_classifier.1} parent=1 // pred_region
      %69 = vsyncadd [#allocation9], 0
      %s70 = sshll.u32 %s5, 4
      %s71 = int_to_ptr.hbm [resolvable:$true] %s70
      %s72 = sshll.u32 [#allocation10], 4
      %s73 = int_to_ptr.vmem [resolvable:$true] %s72
      %78 = dma.hbm_to_vmem [thread:$0]  %s71, 2048, %s73, [#allocation9], 64, 64, 4
    $region25: #{multimodal_emotion_classifier.1} parent=1 // pred_fallthru
      _
    // Predicated region
    $region26: #{multimodal_emotion_classifier.1} parent=1 // pred_check
      _
    $region27: #{multimodal_emotion_classifier.1} parent=1 // pred_check_branch
      %80 = sbr.rel (0) target = $region29
    $region28: #{multimodal_emotion_classifier.1} parent=1 // pred_region
      _
    $region29: #{multimodal_emotion_classifier.1} parent=1 // pred_fallthru
      _
    // Predicated region
    $region30: #{multimodal_emotion_classifier.1} parent=1 // pred_check
      _
    $region31: #{multimodal_emotion_classifier.1} parent=1 // pred_check_branch
      %82 = sbr.rel (0) target = $region33
    $region32: #{multimodal_emotion_classifier.1} parent=1 // pred_region
      %84 = dma.done [#allocation3], 512
    $region33: #{multimodal_emotion_classifier.1} parent=1 // pred_fallthru
      _
    // Predicated region
    $region34: #{multimodal_emotion_classifier.1} parent=1 // pred_check
      _
    $region35: #{multimodal_emotion_classifier.1} parent=1 // pred_check_branch
      %86 = sbr.rel (0) target = $region37
    $region36: #{multimodal_emotion_classifier.1} parent=1 // pred_region
      %88 = dma.done [#allocation6], 128
    $region37: #{multimodal_emotion_classifier.1} parent=1 // pred_fallthru
      _
    // Predicated region
    $region38: #{multimodal_emotion_classifier.1} parent=1 // pred_check
      _
    $region39: #{multimodal_emotion_classifier.1} parent=1 // pred_check_branch
      %90 = sbr.rel (0) target = $region41
    $region40: #{multimodal_emotion_classifier.1} parent=1 // pred_region
      %92 = dma.done [#allocation6], 8192
    $region41: #{multimodal_emotion_classifier.1} parent=1 // pred_fallthru
      _
    // Predicated region
    $region42: #{multimodal_emotion_classifier.1} parent=1 // pred_check
      _
    $region43: #{multimodal_emotion_classifier.1} parent=1 // pred_check_branch
      %94 = sbr.rel (0) target = $region45
    $region44: #{multimodal_emotion_classifier.1} parent=1 // pred_region
      %96 = dma.done [#allocation9], 640
    $region45: #{multimodal_emotion_classifier.1} parent=1 // pred_fallthru
      _
    // Predicated region
    $region46: #{multimodal_emotion_classifier.1} parent=1 // pred_check
      _
    $region47: #{multimodal_emotion_classifier.1} parent=1 // pred_check_branch
      %98 = sbr.rel (0) target = $region49
    $region48: #{multimodal_emotion_classifier.1} parent=1 // pred_region
      %100 = dma.done [#allocation9], 2048
    $region49: #{multimodal_emotion_classifier.1} parent=1 // pred_fallthru
      _
    %v102 = vld [vmem:[#allocation2] sm:$0xff]
    %v103 = vld [vmem:[#allocation2 + $0x8] sm:$0xff]
    %v104 = vld [vmem:[#allocation2 + $0x10] sm:$0xff]
    %v105 = vld [vmem:[#allocation2 + $0x18] sm:$0xff]
    %v106 = vpack.c.bf16 %v102, %v102
    %v107 = vpack.c.bf16 %v103, %v103
    %v108 = vpack.c.bf16 %v104, %v104
    %v109 = vpack.c.bf16 %v105, %v105
    %v110 = vld [vmem:[#allocation7] sm:$0xff]
    %v111 = vld [vmem:[#allocation7 + $0x8] sm:$0xff]
    %v112 = vld [vmem:[#allocation7 + $0x10] sm:$0xff]
    %v113 = vld [vmem:[#allocation7 + $0x18] sm:$0xff]
    %v114 = vld [vmem:[#allocation7 + $0x20] sm:$0xff]
    %v115 = vld [vmem:[#allocation7 + $0x28] sm:$0xff]
    %v116 = vld [vmem:[#allocation7 + $0x30] sm:$0xff]
    %v117 = vld [vmem:[#allocation7 + $0x38] sm:$0xff]
    %v118 = vld [vmem:[#allocation7 + $0x40] sm:$0xff]
    %v119 = vld [vmem:[#allocation7 + $0x48] sm:$0xff]
    %v120 = vld [vmem:[#allocation7 + $0x50] sm:$0xff]
    %v121 = vld [vmem:[#allocation7 + $0x58] sm:$0xff]
    %v122 = vld [vmem:[#allocation7 + $0x60] sm:$0xff]
    %v123 = vld [vmem:[#allocation7 + $0x68] sm:$0xff]
    %v124 = vld [vmem:[#allocation7 + $0x70] sm:$0xff]
    %v125 = vld [vmem:[#allocation7 + $0x78] sm:$0xff]
    %v126 = vld [vmem:[#allocation7 + $0x80] sm:$0xff]
    %v127 = vld [vmem:[#allocation7 + $0x88] sm:$0xff]
    %v128 = vld [vmem:[#allocation7 + $0x90] sm:$0xff]
    %v129 = vld [vmem:[#allocation7 + $0x98] sm:$0xff]
    %v130 = vld [vmem:[#allocation7 + $0xa0] sm:$0xff]
    %v131 = vld [vmem:[#allocation7 + $0xa8] sm:$0xff]
    %v132 = vld [vmem:[#allocation7 + $0xb0] sm:$0xff]
    %v133 = vld [vmem:[#allocation7 + $0xb8] sm:$0xff]
    %v134 = vld [vmem:[#allocation7 + $0xc0] sm:$0xff]
    %v135 = vld [vmem:[#allocation7 + $0xc8] sm:$0xff]
    %v136 = vld [vmem:[#allocation7 + $0xd0] sm:$0xff]
    %v137 = vld [vmem:[#allocation7 + $0xd8] sm:$0xff]
    %v138 = vld [vmem:[#allocation7 + $0xe0] sm:$0xff]
    %v139 = vld [vmem:[#allocation7 + $0xe8] sm:$0xff]
    %v140 = vld [vmem:[#allocation7 + $0xf0] sm:$0xff]
    %v141 = vld [vmem:[#allocation7 + $0xf8] sm:$0xff]
    %v142 = vld [vmem:[#allocation7 + $0x100] sm:$0xff]
    %v143 = vld [vmem:[#allocation7 + $0x108] sm:$0xff]
    %v144 = vld [vmem:[#allocation7 + $0x110] sm:$0xff]
    %v145 = vld [vmem:[#allocation7 + $0x118] sm:$0xff]
    %v146 = vld [vmem:[#allocation7 + $0x120] sm:$0xff]
    %v147 = vld [vmem:[#allocation7 + $0x128] sm:$0xff]
    %v148 = vld [vmem:[#allocation7 + $0x130] sm:$0xff]
    %v149 = vld [vmem:[#allocation7 + $0x138] sm:$0xff]
    %v150 = vld [vmem:[#allocation7 + $0x140] sm:$0xff]
    %v151 = vld [vmem:[#allocation7 + $0x148] sm:$0xff]
    %v152 = vld [vmem:[#allocation7 + $0x150] sm:$0xff]
    %v153 = vld [vmem:[#allocation7 + $0x158] sm:$0xff]
    %v154 = vld [vmem:[#allocation7 + $0x160] sm:$0xff]
    %v155 = vld [vmem:[#allocation7 + $0x168] sm:$0xff]
    %v156 = vld [vmem:[#allocation7 + $0x170] sm:$0xff]
    %v157 = vld [vmem:[#allocation7 + $0x178] sm:$0xff]
    %v158 = vld [vmem:[#allocation7 + $0x180] sm:$0xff]
    %v159 = vld [vmem:[#allocation7 + $0x188] sm:$0xff]
    %v160 = vld [vmem:[#allocation7 + $0x190] sm:$0xff]
    %v161 = vld [vmem:[#allocation7 + $0x198] sm:$0xff]
    %v162 = vld [vmem:[#allocation7 + $0x1a0] sm:$0xff]
    %v163 = vld [vmem:[#allocation7 + $0x1a8] sm:$0xff]
    %v164 = vld [vmem:[#allocation7 + $0x1b0] sm:$0xff]
    %v165 = vld [vmem:[#allocation7 + $0x1b8] sm:$0xff]
    %v166 = vld [vmem:[#allocation7 + $0x1c0] sm:$0xff]
    %v167 = vld [vmem:[#allocation7 + $0x1c8] sm:$0xff]
    %v168 = vld [vmem:[#allocation7 + $0x1d0] sm:$0xff]
    %v169 = vld [vmem:[#allocation7 + $0x1d8] sm:$0xff]
    %v170 = vld [vmem:[#allocation7 + $0x1e0] sm:$0xff]
    %v171 = vld [vmem:[#allocation7 + $0x1e8] sm:$0xff]
    %v172 = vld [vmem:[#allocation7 + $0x1f0] sm:$0xff]
    %v173 = vld [vmem:[#allocation7 + $0x1f8] sm:$0xff]
    %v174 = vld [vmem:[#allocation5] sm:$0xff]
    %v175 = vpack.c.bf16 %v174, %v174
    %v176 = vld [vmem:[#allocation8] sm:$0xff]
    %v177 = vld [vmem:[#allocation8 + $0x8] sm:$0xff]
    %v178 = vld [vmem:[#allocation8 + $0x10] sm:$0xff]
    %v179 = vld [vmem:[#allocation8 + $0x18] sm:$0xff]
    %v180 = vld [vmem:[#allocation8 + $0x20] sm:$0xff]
    %v186 = vunpack.c.l.b16 %v176
    %v187 = vunpack.c.h.b16 %v176
    %v188 = vunpack.c.l.b16 %v177
    %v189 = vunpack.c.h.b16 %v177
    %v190 = vunpack.c.l.b16 %v178
    %v191 = vunpack.c.h.b16 %v178
    %v192 = vunpack.c.l.b16 %v179
    %v193 = vunpack.c.h.b16 %v179
    %v194 = vunpack.c.l.b16 %v180
    %v195 = vunpack.c.h.b16 %v180
    %v196 = vpack.c.b16 %v188, %v186
    %v197 = vpack.c.b16 %v189, %v187
    %v198 = vpack.c.b16 %v192, %v190
    %v199 = vpack.c.b16 %v193, %v191
    %v200 = vpack.c.b16 %v194, %v194
    %v201 = vpack.c.b16 %v195, %v195
    %vm206 = vcmask 326656
    %v208 = vsel %vm206, %v175, 0
    %vm210 = vcmask 1043456
    %v212 = vsel %vm210, %v200, 0
    %v215 = vsel %vm210, %v201, 0
    %217 = vmatpush.bf16.msra.mxu0 0
    %218 = vmatpush.bf16.msra.mxu0 0
    %219 = vmatpush.bf16.msra.mxu0 0
    %220 = vmatpush.bf16.msra.mxu0 0
    %221 = vmatpush.bf16.msra.mxu0 0
    %222 = vmatpush.bf16.msra.mxu0 %v212
    %223 = vmatpush.bf16.msra.mxu0 %v198
    %224 = vmatpush.bf16.msra.mxu0 %v196
    %225 = vmatmul.bf16.gmra.mxu0 %v208
    %v226 = vpop.f32.mrf.mxu0
    %v227 = vadd.f32 0.0, %v226
    %v228 = vpop.f32.mrf.mxu0
    %229 = vdwg.mxu0
    %230 = vmatpush.bf16.msra.mxu0 0
    %231 = vmatpush.bf16.msra.mxu0 0
    %232 = vmatpush.bf16.msra.mxu0 0
    %233 = vmatpush.bf16.msra.mxu0 0
    %234 = vmatpush.bf16.msra.mxu0 0
    %235 = vmatpush.bf16.msra.mxu0 %v215
    %236 = vmatpush.bf16.msra.mxu0 %v199
    %237 = vmatpush.bf16.msra.mxu0 %v197
    %238 = vmatmul.bf16.gmra.mxu0 %v208
    %v239 = vpop.f32.mrf.mxu0
    %v240 = vadd.f32 0.0, %v239
    %v241 = vpop.f32.mrf.mxu0
    %242 = vdwg.mxu0
    %v307 = vunpack.c.l.b16 %v110
    %v308 = vunpack.c.h.b16 %v110
    %v309 = vunpack.c.l.b16 %v111
    %v310 = vunpack.c.h.b16 %v111
    %v311 = vunpack.c.l.b16 %v112
    %v312 = vunpack.c.h.b16 %v112
    %v313 = vunpack.c.l.b16 %v113
    %v314 = vunpack.c.h.b16 %v113
    %v315 = vunpack.c.l.b16 %v114
    %v316 = vunpack.c.h.b16 %v114
    %v317 = vunpack.c.l.b16 %v115
    %v318 = vunpack.c.h.b16 %v115
    %v319 = vunpack.c.l.b16 %v116
    %v320 = vunpack.c.h.b16 %v116
    %v321 = vunpack.c.l.b16 %v117
    %v322 = vunpack.c.h.b16 %v117
    %v323 = vunpack.c.l.b16 %v118
    %v324 = vunpack.c.h.b16 %v118
    %v325 = vunpack.c.l.b16 %v119
    %v326 = vunpack.c.h.b16 %v119
    %v327 = vunpack.c.l.b16 %v120
    %v328 = vunpack.c.h.b16 %v120
    %v329 = vunpack.c.l.b16 %v121
    %v330 = vunpack.c.h.b16 %v121
    %v331 = vunpack.c.l.b16 %v122
    %v332 = vunpack.c.h.b16 %v122
    %v333 = vunpack.c.l.b16 %v123
    %v334 = vunpack.c.h.b16 %v123
    %v335 = vunpack.c.l.b16 %v124
    %v336 = vunpack.c.h.b16 %v124
    %v337 = vunpack.c.l.b16 %v125
    %v338 = vunpack.c.h.b16 %v125
    %v339 = vunpack.c.l.b16 %v126
    %v340 = vunpack.c.h.b16 %v126
    %v341 = vunpack.c.l.b16 %v127
    %v342 = vunpack.c.h.b16 %v127
    %v343 = vunpack.c.l.b16 %v128
    %v344 = vunpack.c.h.b16 %v128
    %v345 = vunpack.c.l.b16 %v129
    %v346 = vunpack.c.h.b16 %v129
    %v347 = vunpack.c.l.b16 %v130
    %v348 = vunpack.c.h.b16 %v130
    %v349 = vunpack.c.l.b16 %v131
    %v350 = vunpack.c.h.b16 %v131
    %v351 = vunpack.c.l.b16 %v132
    %v352 = vunpack.c.h.b16 %v132
    %v353 = vunpack.c.l.b16 %v133
    %v354 = vunpack.c.h.b16 %v133
    %v355 = vunpack.c.l.b16 %v134
    %v356 = vunpack.c.h.b16 %v134
    %v357 = vunpack.c.l.b16 %v135
    %v358 = vunpack.c.h.b16 %v135
    %v359 = vunpack.c.l.b16 %v136
    %v360 = vunpack.c.h.b16 %v136
    %v361 = vunpack.c.l.b16 %v137
    %v362 = vunpack.c.h.b16 %v137
    %v363 = vunpack.c.l.b16 %v138
    %v364 = vunpack.c.h.b16 %v138
    %v365 = vunpack.c.l.b16 %v139
    %v366 = vunpack.c.h.b16 %v139
    %v367 = vunpack.c.l.b16 %v140
    %v368 = vunpack.c.h.b16 %v140
    %v369 = vunpack.c.l.b16 %v141
    %v370 = vunpack.c.h.b16 %v141
    %v371 = vunpack.c.l.b16 %v142
    %v372 = vunpack.c.h.b16 %v142
    %v373 = vunpack.c.l.b16 %v143
    %v374 = vunpack.c.h.b16 %v143
    %v375 = vunpack.c.l.b16 %v144
    %v376 = vunpack.c.h.b16 %v144
    %v377 = vunpack.c.l.b16 %v145
    %v378 = vunpack.c.h.b16 %v145
    %v379 = vunpack.c.l.b16 %v146
    %v380 = vunpack.c.h.b16 %v146
    %v381 = vunpack.c.l.b16 %v147
    %v382 = vunpack.c.h.b16 %v147
    %v383 = vunpack.c.l.b16 %v148
    %v384 = vunpack.c.h.b16 %v148
    %v385 = vunpack.c.l.b16 %v149
    %v386 = vunpack.c.h.b16 %v149
    %v387 = vunpack.c.l.b16 %v150
    %v388 = vunpack.c.h.b16 %v150
    %v389 = vunpack.c.l.b16 %v151
    %v390 = vunpack.c.h.b16 %v151
    %v391 = vunpack.c.l.b16 %v152
    %v392 = vunpack.c.h.b16 %v152
    %v393 = vunpack.c.l.b16 %v153
    %v394 = vunpack.c.h.b16 %v153
    %v395 = vunpack.c.l.b16 %v154
    %v396 = vunpack.c.h.b16 %v154
    %v397 = vunpack.c.l.b16 %v155
    %v398 = vunpack.c.h.b16 %v155
    %v399 = vunpack.c.l.b16 %v156
    %v400 = vunpack.c.h.b16 %v156
    %v401 = vunpack.c.l.b16 %v157
    %v402 = vunpack.c.h.b16 %v157
    %v403 = vunpack.c.l.b16 %v158
    %v404 = vunpack.c.h.b16 %v158
    %v405 = vunpack.c.l.b16 %v159
    %v406 = vunpack.c.h.b16 %v159
    %v407 = vunpack.c.l.b16 %v160
    %v408 = vunpack.c.h.b16 %v160
    %v409 = vunpack.c.l.b16 %v161
    %v410 = vunpack.c.h.b16 %v161
    %v411 = vunpack.c.l.b16 %v162
    %v412 = vunpack.c.h.b16 %v162
    %v413 = vunpack.c.l.b16 %v163
    %v414 = vunpack.c.h.b16 %v163
    %v415 = vunpack.c.l.b16 %v164
    %v416 = vunpack.c.h.b16 %v164
    %v417 = vunpack.c.l.b16 %v165
    %v418 = vunpack.c.h.b16 %v165
    %v419 = vunpack.c.l.b16 %v166
    %v420 = vunpack.c.h.b16 %v166
    %v421 = vunpack.c.l.b16 %v167
    %v422 = vunpack.c.h.b16 %v167
    %v423 = vunpack.c.l.b16 %v168
    %v424 = vunpack.c.h.b16 %v168
    %v425 = vunpack.c.l.b16 %v169
    %v426 = vunpack.c.h.b16 %v169
    %v427 = vunpack.c.l.b16 %v170
    %v428 = vunpack.c.h.b16 %v170
    %v429 = vunpack.c.l.b16 %v171
    %v430 = vunpack.c.h.b16 %v171
    %v431 = vunpack.c.l.b16 %v172
    %v432 = vunpack.c.h.b16 %v172
    %v433 = vunpack.c.l.b16 %v173
    %v434 = vunpack.c.h.b16 %v173
    %v435 = vpack.c.b16 %v309, %v307
    %v436 = vpack.c.b16 %v310, %v308
    %v437 = vpack.c.b16 %v313, %v311
    %v438 = vpack.c.b16 %v314, %v312
    %v439 = vpack.c.b16 %v317, %v315
    %v440 = vpack.c.b16 %v318, %v316
    %v441 = vpack.c.b16 %v321, %v319
    %v442 = vpack.c.b16 %v322, %v320
    %v443 = vpack.c.b16 %v325, %v323
    %v444 = vpack.c.b16 %v326, %v324
    %v445 = vpack.c.b16 %v329, %v327
    %v446 = vpack.c.b16 %v330, %v328
    %v447 = vpack.c.b16 %v333, %v331
    %v448 = vpack.c.b16 %v334, %v332
    %v449 = vpack.c.b16 %v337, %v335
    %v450 = vpack.c.b16 %v338, %v336
    %v451 = vpack.c.b16 %v341, %v339
    %v452 = vpack.c.b16 %v342, %v340
    %v453 = vpack.c.b16 %v345, %v343
    %v454 = vpack.c.b16 %v346, %v344
    %v455 = vpack.c.b16 %v349, %v347
    %v456 = vpack.c.b16 %v350, %v348
    %v457 = vpack.c.b16 %v353, %v351
    %v458 = vpack.c.b16 %v354, %v352
    %v459 = vpack.c.b16 %v357, %v355
    %v460 = vpack.c.b16 %v358, %v356
    %v461 = vpack.c.b16 %v361, %v359
    %v462 = vpack.c.b16 %v362, %v360
    %v463 = vpack.c.b16 %v365, %v363
    %v464 = vpack.c.b16 %v366, %v364
    %v465 = vpack.c.b16 %v369, %v367
    %v466 = vpack.c.b16 %v370, %v368
    %v467 = vpack.c.b16 %v373, %v371
    %v468 = vpack.c.b16 %v374, %v372
    %v469 = vpack.c.b16 %v377, %v375
    %v470 = vpack.c.b16 %v378, %v376
    %v471 = vpack.c.b16 %v381, %v379
    %v472 = vpack.c.b16 %v382, %v380
    %v473 = vpack.c.b16 %v385, %v383
    %v474 = vpack.c.b16 %v386, %v384
    %v475 = vpack.c.b16 %v389, %v387
    %v476 = vpack.c.b16 %v390, %v388
    %v477 = vpack.c.b16 %v393, %v391
    %v478 = vpack.c.b16 %v394, %v392
    %v479 = vpack.c.b16 %v397, %v395
    %v480 = vpack.c.b16 %v398, %v396
    %v481 = vpack.c.b16 %v401, %v399
    %v482 = vpack.c.b16 %v402, %v400
    %v483 = vpack.c.b16 %v405, %v403
    %v484 = vpack.c.b16 %v406, %v404
    %v485 = vpack.c.b16 %v409, %v407
    %v486 = vpack.c.b16 %v410, %v408
    %v487 = vpack.c.b16 %v413, %v411
    %v488 = vpack.c.b16 %v414, %v412
    %v489 = vpack.c.b16 %v417, %v415
    %v490 = vpack.c.b16 %v418, %v416
    %v491 = vpack.c.b16 %v421, %v419
    %v492 = vpack.c.b16 %v422, %v420
    %v493 = vpack.c.b16 %v425, %v423
    %v494 = vpack.c.b16 %v426, %v424
    %v495 = vpack.c.b16 %v429, %v427
    %v496 = vpack.c.b16 %v430, %v428
    %v497 = vpack.c.b16 %v433, %v431
    %v498 = vpack.c.b16 %v434, %v432
    %563 = vmatpush.bf16.msra.mxu0 %v449
    %564 = vmatpush.bf16.msra.mxu0 %v447
    %565 = vmatpush.bf16.msra.mxu0 %v445
    %566 = vmatpush.bf16.msra.mxu0 %v443
    %567 = vmatpush.bf16.msra.mxu0 %v441
    %568 = vmatpush.bf16.msra.mxu0 %v439
    %569 = vmatpush.bf16.msra.mxu0 %v437
    %570 = vmatpush.bf16.msra.mxu0 %v435
    %571 = vmatmul.bf16.gmra.mxu0 %v106
    %v572 = vpop.f32.mrf.mxu0
    %v573 = vadd.f32 %v227, %v572
    %v574 = vpop.f32.mrf.mxu0
    %575 = vdwg.mxu0
    %576 = vmatpush.bf16.msra.mxu0 %v465
    %577 = vmatpush.bf16.msra.mxu0 %v463
    %578 = vmatpush.bf16.msra.mxu0 %v461
    %579 = vmatpush.bf16.msra.mxu0 %v459
    %580 = vmatpush.bf16.msra.mxu0 %v457
    %581 = vmatpush.bf16.msra.mxu0 %v455
    %582 = vmatpush.bf16.msra.mxu0 %v453
    %583 = vmatpush.bf16.msra.mxu0 %v451
    %584 = vmatmul.bf16.gmra.mxu0 %v107
    %v585 = vpop.f32.mrf.mxu0
    %v586 = vadd.f32 %v573, %v585
    %v587 = vpop.f32.mrf.mxu0
    %588 = vdwg.mxu0
    %589 = vmatpush.bf16.msra.mxu0 %v481
    %590 = vmatpush.bf16.msra.mxu0 %v479
    %591 = vmatpush.bf16.msra.mxu0 %v477
    %592 = vmatpush.bf16.msra.mxu0 %v475
    %593 = vmatpush.bf16.msra.mxu0 %v473
    %594 = vmatpush.bf16.msra.mxu0 %v471
    %595 = vmatpush.bf16.msra.mxu0 %v469
    %596 = vmatpush.bf16.msra.mxu0 %v467
    %597 = vmatmul.bf16.gmra.mxu0 %v108
    %v598 = vpop.f32.mrf.mxu0
    %v599 = vadd.f32 %v586, %v598
    %v600 = vpop.f32.mrf.mxu0
    %601 = vdwg.mxu0
    %602 = vmatpush.bf16.msra.mxu0 %v497
    %603 = vmatpush.bf16.msra.mxu0 %v495
    %604 = vmatpush.bf16.msra.mxu0 %v493
    %605 = vmatpush.bf16.msra.mxu0 %v491
    %606 = vmatpush.bf16.msra.mxu0 %v489
    %607 = vmatpush.bf16.msra.mxu0 %v487
    %608 = vmatpush.bf16.msra.mxu0 %v485
    %609 = vmatpush.bf16.msra.mxu0 %v483
    %610 = vmatmul.bf16.gmra.mxu0 %v109
    %v611 = vpop.f32.mrf.mxu0
    %v612 = vadd.f32 %v599, %v611
    %v613 = vpop.f32.mrf.mxu0
    %614 = vdwg.mxu0
    %615 = vmatpush.bf16.msra.mxu0 %v450
    %616 = vmatpush.bf16.msra.mxu0 %v448
    %617 = vmatpush.bf16.msra.mxu0 %v446
    %618 = vmatpush.bf16.msra.mxu0 %v444
    %619 = vmatpush.bf16.msra.mxu0 %v442
    %620 = vmatpush.bf16.msra.mxu0 %v440
    %621 = vmatpush.bf16.msra.mxu0 %v438
    %622 = vmatpush.bf16.msra.mxu0 %v436
    %623 = vmatmul.bf16.gmra.mxu0 %v106
    %v624 = vpop.f32.mrf.mxu0
    %v625 = vadd.f32 %v240, %v624
    %v626 = vpop.f32.mrf.mxu0
    %627 = vdwg.mxu0
    %628 = vmatpush.bf16.msra.mxu0 %v466
    %629 = vmatpush.bf16.msra.mxu0 %v464
    %630 = vmatpush.bf16.msra.mxu0 %v462
    %631 = vmatpush.bf16.msra.mxu0 %v460
    %632 = vmatpush.bf16.msra.mxu0 %v458
    %633 = vmatpush.bf16.msra.mxu0 %v456
    %634 = vmatpush.bf16.msra.mxu0 %v454
    %635 = vmatpush.bf16.msra.mxu0 %v452
    %636 = vmatmul.bf16.gmra.mxu0 %v107
    %v637 = vpop.f32.mrf.mxu0
    %v638 = vadd.f32 %v625, %v637
    %v639 = vpop.f32.mrf.mxu0
    %640 = vdwg.mxu0
    %641 = vmatpush.bf16.msra.mxu0 %v482
    %642 = vmatpush.bf16.msra.mxu0 %v480
    %643 = vmatpush.bf16.msra.mxu0 %v478
    %644 = vmatpush.bf16.msra.mxu0 %v476
    %645 = vmatpush.bf16.msra.mxu0 %v474
    %646 = vmatpush.bf16.msra.mxu0 %v472
    %647 = vmatpush.bf16.msra.mxu0 %v470
    %648 = vmatpush.bf16.msra.mxu0 %v468
    %649 = vmatmul.bf16.gmra.mxu0 %v108
    %v650 = vpop.f32.mrf.mxu0
    %v651 = vadd.f32 %v638, %v650
    %v652 = vpop.f32.mrf.mxu0
    %653 = vdwg.mxu0
    %654 = vmatpush.bf16.msra.mxu0 %v498
    %655 = vmatpush.bf16.msra.mxu0 %v496
    %656 = vmatpush.bf16.msra.mxu0 %v494
    %657 = vmatpush.bf16.msra.mxu0 %v492
    %658 = vmatpush.bf16.msra.mxu0 %v490
    %659 = vmatpush.bf16.msra.mxu0 %v488
    %660 = vmatpush.bf16.msra.mxu0 %v486
    %661 = vmatpush.bf16.msra.mxu0 %v484
    %662 = vmatmul.bf16.gmra.mxu0 %v109
    %v663 = vpop.f32.mrf.mxu0
    %v664 = vadd.f32 %v651, %v663
    %v665 = vpop.f32.mrf.mxu0
    %666 = vdwg.mxu0
    %v667 = vld [vmem:[%s4] sm:$0x3]
    %v669 = vperm.slane %v667, 0
    %v670 = vperm.slane %v667, 1
    %v673 = vadd.f32 %v612, %v669
    %v674 = vadd.f32 %v664, %v670
    %v675 = vmax.f32 %v673, 0.0
    %v676 = vmax.f32 %v674, 0.0
    %v677 = vpack.c.bf16 %v675, %v675
    %v678 = vpack.c.bf16 %v676, %v676
    %v679 = vld [vmem:[#allocation10] sm:$0xf]
    %v680 = vld [vmem:[#allocation10 + $0x4] sm:$0xf]
    %v681 = vld [vmem:[#allocation10 + $0x8] sm:$0xf]
    %v682 = vld [vmem:[#allocation10 + $0xc] sm:$0xf]
    %v683 = vld [vmem:[#allocation10 + $0x10] sm:$0xf]
    %v684 = vld [vmem:[#allocation10 + $0x14] sm:$0xf]
    %v685 = vld [vmem:[#allocation10 + $0x18] sm:$0xf]
    %v686 = vld [vmem:[#allocation10 + $0x1c] sm:$0xf]
    %v687 = vld [vmem:[#allocation10 + $0x20] sm:$0xf]
    %v688 = vld [vmem:[#allocation10 + $0x24] sm:$0xf]
    %v689 = vld [vmem:[#allocation10 + $0x28] sm:$0xf]
    %v690 = vld [vmem:[#allocation10 + $0x2c] sm:$0xf]
    %v691 = vld [vmem:[#allocation10 + $0x30] sm:$0xf]
    %v692 = vld [vmem:[#allocation10 + $0x34] sm:$0xf]
    %v693 = vld [vmem:[#allocation10 + $0x38] sm:$0xf]
    %v694 = vld [vmem:[#allocation10 + $0x3c] sm:$0xf]
    %v695 = vld [vmem:[#allocation10 + $0x40] sm:$0xf]
    %v696 = vld [vmem:[#allocation10 + $0x44] sm:$0xf]
    %v697 = vld [vmem:[#allocation10 + $0x48] sm:$0xf]
    %v698 = vld [vmem:[#allocation10 + $0x4c] sm:$0xf]
    %v699 = vld [vmem:[#allocation10 + $0x50] sm:$0xf]
    %v700 = vld [vmem:[#allocation10 + $0x54] sm:$0xf]
    %v701 = vld [vmem:[#allocation10 + $0x58] sm:$0xf]
    %v702 = vld [vmem:[#allocation10 + $0x5c] sm:$0xf]
    %v703 = vld [vmem:[#allocation10 + $0x60] sm:$0xf]
    %v704 = vld [vmem:[#allocation10 + $0x64] sm:$0xf]
    %v705 = vld [vmem:[#allocation10 + $0x68] sm:$0xf]
    %v706 = vld [vmem:[#allocation10 + $0x6c] sm:$0xf]
    %v707 = vld [vmem:[#allocation10 + $0x70] sm:$0xf]
    %v708 = vld [vmem:[#allocation10 + $0x74] sm:$0xf]
    %v709 = vld [vmem:[#allocation10 + $0x78] sm:$0xf]
    %v710 = vld [vmem:[#allocation10 + $0x7c] sm:$0xf]
    %v711 = vld [vmem:[%s6] sm:$0x1]
    %v713 = vperm.slane %v711, 0
    %v747 = vunpack.c.l.b16 %v679
    %v748 = vunpack.c.l.b16 %v680
    %v749 = vunpack.c.l.b16 %v681
    %v750 = vunpack.c.l.b16 %v682
    %v751 = vunpack.c.l.b16 %v683
    %v752 = vunpack.c.l.b16 %v684
    %v753 = vunpack.c.l.b16 %v685
    %v754 = vunpack.c.l.b16 %v686
    %v755 = vunpack.c.l.b16 %v687
    %v756 = vunpack.c.l.b16 %v688
    %v757 = vunpack.c.l.b16 %v689
    %v758 = vunpack.c.l.b16 %v690
    %v759 = vunpack.c.l.b16 %v691
    %v760 = vunpack.c.l.b16 %v692
    %v761 = vunpack.c.l.b16 %v693
    %v762 = vunpack.c.l.b16 %v694
    %v763 = vunpack.c.l.b16 %v695
    %v764 = vunpack.c.l.b16 %v696
    %v765 = vunpack.c.l.b16 %v697
    %v766 = vunpack.c.l.b16 %v698
    %v767 = vunpack.c.l.b16 %v699
    %v768 = vunpack.c.l.b16 %v700
    %v769 = vunpack.c.l.b16 %v701
    %v770 = vunpack.c.l.b16 %v702
    %v771 = vunpack.c.l.b16 %v703
    %v772 = vunpack.c.l.b16 %v704
    %v773 = vunpack.c.l.b16 %v705
    %v774 = vunpack.c.l.b16 %v706
    %v775 = vunpack.c.l.b16 %v707
    %v776 = vunpack.c.l.b16 %v708
    %v777 = vunpack.c.l.b16 %v709
    %v778 = vunpack.c.l.b16 %v710
    %v779 = vpack.c.b16 %v748, %v747
    %v780 = vpack.c.b16 %v750, %v749
    %v781 = vpack.c.b16 %v752, %v751
    %v782 = vpack.c.b16 %v754, %v753
    %v783 = vpack.c.b16 %v756, %v755
    %v784 = vpack.c.b16 %v758, %v757
    %v785 = vpack.c.b16 %v760, %v759
    %v786 = vpack.c.b16 %v762, %v761
    %v787 = vpack.c.b16 %v764, %v763
    %v788 = vpack.c.b16 %v766, %v765
    %v789 = vpack.c.b16 %v768, %v767
    %v790 = vpack.c.b16 %v770, %v769
    %v791 = vpack.c.b16 %v772, %v771
    %v792 = vpack.c.b16 %v774, %v773
    %v793 = vpack.c.b16 %v776, %v775
    %v794 = vpack.c.b16 %v778, %v777
    %811 = vmatpush.bf16.msra.mxu0 %v786
    %812 = vmatpush.bf16.msra.mxu0 %v785
    %813 = vmatpush.bf16.msra.mxu0 %v784
    %814 = vmatpush.bf16.msra.mxu0 %v783
    %815 = vmatpush.bf16.msra.mxu0 %v782
    %816 = vmatpush.bf16.msra.mxu0 %v781
    %817 = vmatpush.bf16.msra.mxu0 %v780
    %818 = vmatpush.bf16.msra.mxu0 %v779
    %819 = vmatmul.bf16.gmra.mxu0 %v677
    %v820 = vpop.f32.mrf.mxu0
    %v821 = vadd.f32 %v713, %v820
    %v822 = vpop.f32.mrf.mxu0
    %823 = vdwg.mxu0
    %824 = vmatpush.bf16.msra.mxu0 %v794
    %825 = vmatpush.bf16.msra.mxu0 %v793
    %826 = vmatpush.bf16.msra.mxu0 %v792
    %827 = vmatpush.bf16.msra.mxu0 %v791
    %828 = vmatpush.bf16.msra.mxu0 %v790
    %829 = vmatpush.bf16.msra.mxu0 %v789
    %830 = vmatpush.bf16.msra.mxu0 %v788
    %831 = vmatpush.bf16.msra.mxu0 %v787
    %832 = vmatmul.bf16.gmra.mxu0 %v678
    %v833 = vpop.f32.mrf.mxu0
    %v834 = vadd.f32 %v821, %v833
    %v835 = vpop.f32.mrf.mxu0
    %836 = vdwg.mxu0
    %v837 = vpack.c.bf16 %v834, %v834
    %838 = vst [vmem:[#allocation11] sm:$0xf] %v837
    // Predicated region
    $region50: #{multimodal_emotion_classifier.1} parent=1 // pred_check
      _
    $region51: #{multimodal_emotion_classifier.1} parent=1 // pred_check_branch
      %840 = sbr.rel (0) target = $region53
    $region52: #{multimodal_emotion_classifier.1} parent=1 // pred_region
      %842 = vsyncadd [#allocation4], 0
      %s844 = sshll.u32 [#allocation11], 4
      %s845 = int_to_ptr.vmem [resolvable:$true] %s844
      %s846 = sshll.u32 %s7, 4
      %s847 = int_to_ptr.hbm [resolvable:$true] %s846
      %849 = dma.vmem_to_hbm [thread:$0]  %s845, 64, %s847, [#allocation4]
    $region53: #{multimodal_emotion_classifier.1} parent=1 // pred_fallthru
      _
    // Predicated region
    $region54: #{multimodal_emotion_classifier.1} parent=1 // pred_check
      _
    $region55: #{multimodal_emotion_classifier.1} parent=1 // pred_check_branch
      %851 = sbr.rel (0) target = $region57
    $region56: #{multimodal_emotion_classifier.1} parent=1 // pred_region
      %853 = dma.done [#allocation4], 64
    $region57: #{multimodal_emotion_classifier.1} parent=1 // pred_fallthru
      _
    %854 = vsyncpa [#allocation3], 1
    %855 = vsyncpa [#allocation6], 1
    %856 = vsyncpa [#allocation9], 1
    %857 = vsyncpa [#allocation4], 1

</llo_original>
